<compile_context>
chip_gen: v7x
topology: tpu7x:2x2x1
jax: 0.10.0
libtpu: 0.0.40
codegen_flags: <defaults>
</compile_context>

<pallas_src>
import functools

import jax
import jax.numpy as jnp
from jax import lax
from jax.experimental import pallas as pl
from jax.experimental.pallas import tpu as pltpu


def _round_up(x, m):
    return ((x + m - 1) // m) * m


def mlp_encoder_kernel(x_ref, w1_ref, b1_ref, w2_ref, b2_ref, o_ref, *, chunk):
    """Feature-major MLP tile.

    x_ref: (in=10, blk)  — batch mapped to the 128-wide lane axis
    w1_ref: (20, 10); b1_ref: (20, 1); w2_ref: (10, 20); b2_ref: (10, 1)
    o_ref: (10, blk)
    """
    # Hoist loop-invariant weight/bias loads once per grid step.
    w1 = w1_ref[...]
    b1 = b1_ref[...]
    w2 = w2_ref[...]
    b2 = b2_ref[...]

    blk = x_ref.shape[-1]
    num_chunks = blk // chunk  # wrapper guarantees exact division

    def body(c, carry):
        off = pl.multiple_of(c * chunk, chunk)          # aligned, lane-dense slices
        x = x_ref[:, pl.ds(off, chunk)]                  # (10, chunk)
        h = jnp.maximum(
            jnp.dot(w1, x, preferred_element_type=jnp.float32) + b1, 0.0)  # (20, chunk)
        y = jnp.maximum(
            jnp.dot(w2, h, preferred_element_type=jnp.float32) + b2, 0.0)  # (10, chunk)
        o_ref[:, pl.ds(off, chunk)] = y.astype(o_ref.dtype)
        return carry

    # Partially unrolled so the LLO scheduler sees the body while keeping the
    # hidden activation's live range bounded (stays in vregs, no big VMEM scratch).
    lax.fori_loop(0, num_chunks, body, 0, unroll=min(num_chunks, 8))


def mlp_encoder(state, w1, b1, w2, b2, *, block_b=32768, chunk_b=1024,
                feature_major_out=False):
    """state: (B, 10); w1: (20, 10); b1: (20,); w2: (10, 20); b2: (10,).

    Weights/biases are in native PyTorch nn.Linear (out, in) layout.
    Returns (B, 10) matching relu(fc2(relu(fc1(state)))), or the feature-major
    (10, B) result if feature_major_out=True (lets a fused consumer skip the
    final transpose).
    """
    B, in_dim = state.shape
    out1 = w1.shape[0]   # 20
    out2 = w2.shape[0]   # 10

    # Balanced, lane-aligned batch tile; quantize to the in-kernel chunk so the
    # chunk loop divides the block exactly. Last grid block may be ragged —
    # Pallas pads the read and drops out-of-bounds output columns.
    num_tiles = pl.cdiv(B, block_b)
    blk = _round_up(pl.cdiv(B, num_tiles), 128)
    if blk > chunk_b:
        blk = _round_up(blk, chunk_b)
    chunk = min(chunk_b, blk)
    grid = (pl.cdiv(B, blk),)

    # Feature-major input; allow_input_fusion lets XLA fuse this transpose into
    # the pallas_call input pipeline instead of a separate HBM round trip.
    x = state.T                                   # (10, B)
    b1_2d = b1.reshape(-1, 1)                     # broadcast along lanes in-kernel
    b2_2d = b2.reshape(-1, 1)

    kernel = functools.partial(mlp_encoder_kernel, chunk=chunk)

    out = pl.pallas_call(
        kernel,
        out_shape=jax.ShapeDtypeStruct((out2, B), state.dtype),
        grid_spec=pltpu.PrefetchScalarGridSpec(
            num_scalar_prefetch=0,
            grid=grid,
            in_specs=[
                pl.BlockSpec((in_dim, blk), lambda i: (0, i)),   # x tile (batch-tiled)
                pl.BlockSpec((out1, in_dim), lambda i: (0, 0)),  # w1 resident
                pl.BlockSpec((out1, 1), lambda i: (0, 0)),       # b1 resident
                pl.BlockSpec((out2, out1), lambda i: (0, 0)),    # w2 resident
                pl.BlockSpec((out2, 1), lambda i: (0, 0)),       # b2 resident
            ],
            out_specs=pl.BlockSpec((out2, blk), lambda i: (0, i)),
        ),
        compiler_params=pltpu.CompilerParams(
            dimension_semantics=("parallel",),
            allow_input_fusion=[True, False, False, False, False],
            vmem_limit_bytes=32 * 1024 * 1024,
        ),
    )(x, w1, b1_2d, w2, b2_2d)

    if feature_major_out:
        return out                                # (10, B)
    return out.T                                  # (B, 10)


def init_params(key):
    """Deterministic init mirroring nn.Linear(10,20) and nn.Linear(20,10).

    Weights are returned in PyTorch's native (out, in) layout, which is exactly
    what the feature-major kernel consumes.
    """
    k1, k2, k3, k4 = jax.random.split(key, 4)
    in1, out1 = 10, 20
    in2, out2 = 20, 10
    bound1 = 1.0 / jnp.sqrt(in1)
    bound2 = 1.0 / jnp.sqrt(in2)
    w1 = jax.random.uniform(k1, (out1, in1), jnp.float32, -bound1, bound1)
    b1 = jax.random.uniform(k2, (out1,), jnp.float32, -bound1, bound1)
    w2 = jax.random.uniform(k3, (out2, in2), jnp.float32, -bound2, bound2)
    b2 = jax.random.uniform(k4, (out2,), jnp.float32, -bound2, bound2)
    return w1, b1, w2, b2


if __name__ == "__main__":
    key = jax.random.PRNGKey(0)
    pkey, xkey = jax.random.split(key)
    w1, b1, w2, b2 = init_params(pkey)

    B = 8
    state = jax.random.normal(xkey, (B, 10), jnp.float32)

    # Jit the wrapper so the feature-major transpose can fuse into the pallas call.
    fwd = jax.jit(mlp_encoder)
    out = jax.block_until_ready(fwd(state, w1, b1, w2, b2))

    # Pure-JAX reference of the PyTorch forward (weights are (out, in)).
    ref = jnp.maximum(state @ w1.T + b1, 0.0)
    ref = jnp.maximum(ref @ w2.T + b2, 0.0)
    assert out.shape == (B, 10)
    assert jnp.allclose(out, ref, atol=1e-5, rtol=1e-5)

    print("KERNEL_OK")
</pallas_src>

<mosaic_0001>
module attributes {stable_mosaic.version = 11 : i64} {
  func.func @mlp_encoder_kernel(%arg0: i32, %arg1: memref<10x128xf32, #tpu.memory_space<vmem>>, %arg2: memref<20x10xf32, #tpu.memory_space<vmem>>, %arg3: memref<20x1xf32, #tpu.memory_space<vmem>>, %arg4: memref<10x20xf32, #tpu.memory_space<vmem>>, %arg5: memref<10x1xf32, #tpu.memory_space<vmem>>, %arg6: memref<10x128xf32, #tpu.memory_space<vmem>>) attributes {dimension_semantics = [#tpu.dimension_semantics<parallel>], iteration_bounds = array<i64: 1>, scalar_prefetch = 0 : i64, scratch_operands = 0 : i64, tpu.core_type = #tpu.core_type<tc>, window_params = [{transform_indices = @transform_0, window_bounds = array<i64: 10, 128>}, {pipeline_mode = #tpu.pipeline_mode<synchronous>, transform_indices = @transform_1, window_bounds = array<i64: 20, 10>}, {pipeline_mode = #tpu.pipeline_mode<synchronous>, transform_indices = @transform_2, window_bounds = array<i64: 20, 1>}, {pipeline_mode = #tpu.pipeline_mode<synchronous>, transform_indices = @transform_3, window_bounds = array<i64: 10, 20>}, {pipeline_mode = #tpu.pipeline_mode<synchronous>, transform_indices = @transform_4, window_bounds = array<i64: 10, 1>}, {transform_indices = @transform_5, window_bounds = array<i64: 10, 128>}]} {
    %c0 = arith.constant 0 : index
    %c0_0 = arith.constant 0 : index
    %0 = vector.load %arg2[%c0, %c0_0] : memref<20x10xf32, #tpu.memory_space<vmem>>, vector<20x10xf32>
    %c0_1 = arith.constant 0 : index
    %c0_2 = arith.constant 0 : index
    %1 = vector.load %arg3[%c0_1, %c0_2] : memref<20x1xf32, #tpu.memory_space<vmem>>, vector<20x1xf32>
    %c0_3 = arith.constant 0 : index
    %c0_4 = arith.constant 0 : index
    %2 = vector.load %arg4[%c0_3, %c0_4] : memref<10x20xf32, #tpu.memory_space<vmem>>, vector<10x20xf32>
    %c0_5 = arith.constant 0 : index
    %c0_6 = arith.constant 0 : index
    %3 = vector.load %arg5[%c0_5, %c0_6] : memref<10x1xf32, #tpu.memory_space<vmem>>, vector<10x1xf32>
    %c0_i32 = arith.constant 0 : i32
    %c128_i32 = arith.constant 128 : i32
    %4 = arith.muli %c0_i32, %c128_i32 : i32
    %5 = tpu.assume_multiple %4, 128 : i32
    %c0_7 = arith.constant 0 : index
    %6 = arith.index_cast %5 : i32 to index
    %7 = vector.load %arg1[%c0_7, %6] : memref<10x128xf32, #tpu.memory_space<vmem>>, vector<10x128xf32>
    %cst = arith.constant dense<0.000000e+00> : vector<20x128xf32>
    %8 = tpu.matmul %0, %7, %cst {dimension_numbers = #tpu.dot_dimension_numbers<[1], [0], [0], [1], [0, 0, 1, 1], [], []>} : vector<20x10xf32>, vector<10x128xf32>, vector<20x128xf32> -> vector<20x128xf32>
    %9 = vector.broadcast %1 : vector<20x1xf32> to vector<20x128xf32>
    %10 = arith.addf %8, %9 : vector<20x128xf32>
    %cst_8 = arith.constant 0.000000e+00 : f32
    %11 = vector.broadcast %cst_8 : f32 to vector<20x128xf32>
    %12 = arith.maximumf %10, %11 : vector<20x128xf32>
    %cst_9 = arith.constant dense<0.000000e+00> : vector<10x128xf32>
    %13 = tpu.matmul %2, %12, %cst_9 {dimension_numbers = #tpu.dot_dimension_numbers<[1], [0], [0], [1], [0, 0, 1, 1], [], []>} : vector<10x20xf32>, vector<20x128xf32>, vector<10x128xf32> -> vector<10x128xf32>
    %14 = vector.broadcast %3 : vector<10x1xf32> to vector<10x128xf32>
    %15 = arith.addf %13, %14 : vector<10x128xf32>
    %cst_10 = arith.constant 0.000000e+00 : f32
    %16 = vector.broadcast %cst_10 : f32 to vector<10x128xf32>
    %17 = arith.maximumf %15, %16 : vector<10x128xf32>
    %c0_11 = arith.constant 0 : index
    %18 = arith.index_cast %5 : i32 to index
    %19 = vector.load %arg6[%c0_11, %18] : memref<10x128xf32, #tpu.memory_space<vmem>>, vector<10x128xf32>
    tpu.vector_store %arg6[%c0_11, %18], %17 {strides = array<i32>} : memref<10x128xf32, #tpu.memory_space<vmem>>, vector<10x128xf32>,
    %c1_i32 = arith.constant 1 : i32
    return
  }
  func.func @transform_0(%arg0: i32) -> (i32, i32) {
    %c0_i32 = arith.constant 0 : i32
    %c0_i32_0 = arith.constant 0 : i32
    return %c0_i32, %arg0 : i32, i32
  }
  func.func @transform_1(%arg0: i32) -> (i32, i32) {
    %c0_i32 = arith.constant 0 : i32
    %c0_i32_0 = arith.constant 0 : i32
    %c0_i32_1 = arith.constant 0 : i32
    return %c0_i32, %c0_i32_0 : i32, i32
  }
  func.func @transform_2(%arg0: i32) -> (i32, i32) {
    %c0_i32 = arith.constant 0 : i32
    %c0_i32_0 = arith.constant 0 : i32
    %c0_i32_1 = arith.constant 0 : i32
    return %c0_i32, %c0_i32_0 : i32, i32
  }
  func.func @transform_3(%arg0: i32) -> (i32, i32) {
    %c0_i32 = arith.constant 0 : i32
    %c0_i32_0 = arith.constant 0 : i32
    %c0_i32_1 = arith.constant 0 : i32
    return %c0_i32, %c0_i32_0 : i32, i32
  }
  func.func @transform_4(%arg0: i32) -> (i32, i32) {
    %c0_i32 = arith.constant 0 : i32
    %c0_i32_0 = arith.constant 0 : i32
    %c0_i32_1 = arith.constant 0 : i32
    return %c0_i32, %c0_i32_0 : i32, i32
  }
  func.func @transform_5(%arg0: i32) -> (i32, i32) {
    %c0_i32 = arith.constant 0 : i32
    %c0_i32_0 = arith.constant 0 : i32
    return %c0_i32, %arg0 : i32, i32
  }
}

</mosaic_0001>

<llo_original>
// kernel: mlp_encoder.2
$region0: #{mlp_encoder.2}
  #allocation0 [shape = 'u32[]', space=smem, size = 0x4, offset = 0x4, fixed_abs, tag = 'smem constant byte address 0x4 - core index']
  #allocation1 [shape = 'u32[144,128]{1,0:T(1,128)}', space=vmem, size = 0x12000, scoped, tag = 'internal scratch']
  %s0 = inlined_call_operand.vmem [shape: f32[20,10], index: 0, kind: input, shape index: {}]
  %s1 = inlined_call_operand.vmem [shape: f32[20,1], index: 1, kind: input, shape index: {}]
  %s2 = inlined_call_operand.vmem [shape: f32[10,20], index: 2, kind: input, shape index: {}]
  %s3 = inlined_call_operand.vmem [shape: f32[10,1], index: 3, kind: input, shape index: {}]
  %s4 = inlined_call_operand.vmem [shape: f32[8,10], index: 4, kind: input, shape index: {}]
  %s5 = inlined_call_operand.vmem [shape: f32[10,8], index: 5, kind: output, shape index: {}]
  %s6 = sld [smem:[#allocation0]]
  $region30: #{mlp_encoder.2} parent=0
    _
  %s8 = ssub.s32 1, %s6
  %s9 = scalar_select 0, %s8, %s6
  $region1: #{mlp_encoder.2} parent=0
    #allocation2 [shape = 'u8[8192]{0}', space=vmem, size = 0x2000, dematerialized = true, scoped, tag = 'FusionAdapter Buffer %fusion.1 = f32[10,8]{1,0:T(8,128)} fusion(%param_4.1), kind=kLoop, calls=%fused_computation.1.clone, metadata={op_name="jit(mlp_encoder)/transpose" stack_frame_id=7}']
    // Predicated region
    $region2: #{mlp_encoder.2} parent=1 // pred_check
      _
    $region3: #{mlp_encoder.2} parent=1 // pred_check_branch
      %11 = sbr.rel (0) target = $region5
    $region4: #{mlp_encoder.2} parent=1 // pred_region
      _
    $region5: #{mlp_encoder.2} parent=1 // pred_fallthru
      _
    // Predicated region
    $region6: #{mlp_encoder.2} parent=1 // pred_check
      _
    $region7: #{mlp_encoder.2} parent=1 // pred_check_branch
      %13 = sbr.rel (0) target = $region9
    $region8: #{mlp_encoder.2} parent=1 // pred_region
      _
    $region9: #{mlp_encoder.2} parent=1 // pred_fallthru
      _
    // Predicated region
    $region10: #{mlp_encoder.2} parent=1 // pred_check
      _
    $region11: #{mlp_encoder.2} parent=1 // pred_check_branch
      %15 = sbr.rel (0) target = $region13
    $region12: #{mlp_encoder.2} parent=1 // pred_region
      _
    $region13: #{mlp_encoder.2} parent=1 // pred_fallthru
      _
    // Predicated region
    $region14: #{mlp_encoder.2} parent=1 // pred_check
      _
    $region15: #{mlp_encoder.2} parent=1 // pred_check_branch
      %17 = sbr.rel (0) target = $region17
    $region16: #{mlp_encoder.2} parent=1 // pred_region
      _
    $region17: #{mlp_encoder.2} parent=1 // pred_fallthru
      _
    // Predicated region
    $region18: #{mlp_encoder.2} parent=1 // pred_check
      _
    $region19: #{mlp_encoder.2} parent=1 // pred_check_branch
      %19 = sbr.rel (0) target = $region21
    $region20: #{mlp_encoder.2} parent=1 // pred_region
      _
    $region21: #{mlp_encoder.2} parent=1 // pred_fallthru
      _
    %v20 = vld [vmem:[%s4] sm:$0xff]
    %22 = vst [vmem:[#allocation2] sm:$0xff] %v20
    %s23 = scalar_lea.vmem %s4, 8
    %v24 = vld [vmem:[%s23] sm:$0xff]
    %s25 = scalar_lea.vmem [#allocation2], 8
    %27 = vst [vmem:[%s25] sm:$0xff] %v24
    %v28 = vld [vmem:[%s0] sm:$0xff]
    %v29 = vld [vmem:[%s0 + $0x8] sm:$0xff]
    %v30 = vld [vmem:[%s0 + $0x10] sm:$0xf]
    %v31 = vld [vmem:[%s1] sm:$0xff]
    %v32 = vld [vmem:[%s1 + $0x8] sm:$0xff]
    %v33 = vld [vmem:[%s1 + $0x10] sm:$0xf]
    %v34 = vld [vmem:[%s2] sm:$0xff]
    %v35 = vld [vmem:[%s2 + $0x8] sm:$0x3]
    %v36 = vld [vmem:[%s3] sm:$0xff]
    %v37 = vld [vmem:[%s3 + $0x8] sm:$0x3]
    %v38 = vld [vmem:[#allocation2] sm:$0xff]
    %v39 = vld [vmem:[#allocation2 + $0x8] sm:$0x3]
    %41 = vset.pattern.permute.xlu0 0
    %42 = vperm.xlu0 %41, %v31
    %v43 = vpop.permute.xlu0 %42
    %46 = vset.pattern.permute.xlu0 0
    %47 = vperm.xlu0 %46, %v32
    %v48 = vpop.permute.xlu0 %47
    %51 = vset.pattern.permute.xlu0 0
    %52 = vperm.xlu0 %51, %v33
    %v53 = vpop.permute.xlu0 %52
    %vm55 = vcmask 80896
    %v57 = vsel %vm55, %v28, 0
    %v60 = vsel %vm55, %v29, 0
    %v63 = vsel %vm55, %v30, 0
    %vm65 = vcmask 1041408
    %v67 = vsel %vm65, %v39, 0
    %69 = vmatprep.subr.mxu0 0.0
    %70 = vmatpush1.msra.mxu0 %v38
    %71 = vmatprep.subr.mxu0 0.0
    %72 = vmatpush1.msra.mxu0 %v67
    %73 = vmatprep.subr.mxu0 0.0
    %74 = vmatpush1.msra.mxu0 0.0
    %75 = vmatprep.subr.mxu0 0.0
    %76 = vmatpush1.msra.mxu0 0.0
    %77 = vmatprep.subr.mxu0 0.0
    %78 = vmatpush1.msra.mxu0 0.0
    %79 = vmatprep.subr.mxu0 0.0
    %80 = vmatpush1.msra.mxu0 0.0
    %81 = vmatprep.subr.mxu0 0.0
    %82 = vmatpush1.msra.mxu0 0.0
    %83 = vmatprep.subr.mxu0 0.0
    %84 = vmatpush1.msra.mxu0 0.0
    %85 = vmatprep.subr.mxu0 0.0
    %86 = vmatpush1.msra.mxu0 0.0
    %87 = vmatprep.subr.mxu0 0.0
    %88 = vmatpush1.msra.mxu0 0.0
    %89 = vmatprep.subr.mxu0 0.0
    %90 = vmatpush1.msra.mxu0 0.0
    %91 = vmatprep.subr.mxu0 0.0
    %92 = vmatpush1.msra.mxu0 0.0
    %93 = vmatprep.subr.mxu0 0.0
    %94 = vmatpush1.msra.mxu0 0.0
    %95 = vmatprep.subr.mxu0 0.0
    %96 = vmatpush1.msra.mxu0 0.0
    %97 = vmatprep.subr.mxu0 0.0
    %98 = vmatpush1.msra.mxu0 0.0
    %99 = vmatprep.subr.mxu0 0.0
    %100 = vmatpush1.msra.mxu0 0.0
    %101 = vmatprep.subr.mxu0 0.0
    %102 = vmatpush1.msra.mxu0 0.0
    %103 = vmatprep.subr.mxu0 0.0
    %104 = vmatpush1.msra.mxu0 0.0
    %105 = vmatprep.subr.mxu0 0.0
    %106 = vmatpush1.msra.mxu0 0.0
    %107 = vmatprep.subr.mxu0 0.0
    %108 = vmatpush1.msra.mxu0 0.0
    %109 = vmatprep.subr.mxu0 0.0
    %110 = vmatpush1.msra.mxu0 0.0
    %111 = vmatprep.subr.mxu0 0.0
    %112 = vmatpush1.msra.mxu0 0.0
    %113 = vmatprep.subr.mxu0 0.0
    %114 = vmatpush1.msra.mxu0 0.0
    %115 = vmatprep.subr.mxu0 0.0
    %116 = vmatpush1.msra.mxu0 0.0
    %117 = vmatprep.subr.mxu0 0.0
    %118 = vmatpush1.msra.mxu0 0.0
    %119 = vmatprep.subr.mxu0 0.0
    %120 = vmatpush1.msra.mxu0 0.0
    %121 = vmatprep.subr.mxu0 0.0
    %122 = vmatpush1.msra.mxu0 0.0
    %123 = vmatprep.subr.mxu0 0.0
    %124 = vmatpush1.msra.mxu0 0.0
    %125 = vmatprep.subr.mxu0 0.0
    %126 = vmatpush1.msra.mxu0 0.0
    %127 = vmatprep.subr.mxu0 0.0
    %128 = vmatpush1.msra.mxu0 0.0
    %129 = vmatprep.subr.mxu0 0.0
    %130 = vmatpush1.msra.mxu0 0.0
    %131 = vmatprep.subr.mxu0 0.0
    %132 = vmatpush1.msra.mxu0 0.0
    %133 = vmatprep.mubr.f32.mxu0 0.0
    %134 = vmatmul.mubr.f32.gmra.mrb[0].mxu0 %v57
    %v135 = vpop.f32.mrb[0].mxu0
    %v136 = vadd.f32 %v43, %v135
    %v137 = vpop.f32.mrb[0].mxu0
    %138 = vmatprep.mubr.f32.mxu0 0.0
    %139 = vmatmul.mubr.f32.gmra.mrb[0].mxu0 %v60
    %v140 = vpop.f32.mrb[0].mxu0
    %v141 = vadd.f32 %v48, %v140
    %v142 = vpop.f32.mrb[0].mxu0
    %143 = vmatprep.mubr.f32.mxu0 0.0
    %144 = vmatmul.mubr.f32.gmra.mrb[0].mxu0 %v63
    %v145 = vpop.f32.mrb[0].mxu0
    %v146 = vadd.f32 %v53, %v145
    %v147 = vpop.f32.mrb[0].mxu0
    %148 = vdwg.mxu0
    %v149 = vmax.f32 %v136, 0.0
    %v150 = vmax.f32 %v141, 0.0
    %v151 = vmax.f32 %v146, 0.0
    %153 = vset.pattern.permute.xlu0 0
    %154 = vperm.xlu0 %153, %v36
    %v155 = vpop.permute.xlu0 %154
    %158 = vset.pattern.permute.xlu0 0
    %159 = vperm.xlu0 %158, %v37
    %v160 = vpop.permute.xlu0 %159
    %vm162 = vcmask 162816
    %v164 = vsel %vm162, %v34, 0
    %v167 = vsel %vm162, %v35, 0
    %vm169 = vcmask 1043456
    %v171 = vsel %vm169, %v151, 0
    %173 = vmatprep.subr.mxu0 0.0
    %174 = vmatpush1.msra.mxu0 %v149
    %175 = vmatprep.subr.mxu0 0.0
    %176 = vmatpush1.msra.mxu0 %v150
    %177 = vmatprep.subr.mxu0 0.0
    %178 = vmatpush1.msra.mxu0 %v171
    %179 = vmatprep.subr.mxu0 0.0
    %180 = vmatpush1.msra.mxu0 0.0
    %181 = vmatprep.subr.mxu0 0.0
    %182 = vmatpush1.msra.mxu0 0.0
    %183 = vmatprep.subr.mxu0 0.0
    %184 = vmatpush1.msra.mxu0 0.0
    %185 = vmatprep.subr.mxu0 0.0
    %186 = vmatpush1.msra.mxu0 0.0
    %187 = vmatprep.subr.mxu0 0.0
    %188 = vmatpush1.msra.mxu0 0.0
    %189 = vmatprep.subr.mxu0 0.0
    %190 = vmatpush1.msra.mxu0 0.0
    %191 = vmatprep.subr.mxu0 0.0
    %192 = vmatpush1.msra.mxu0 0.0
    %193 = vmatprep.subr.mxu0 0.0
    %194 = vmatpush1.msra.mxu0 0.0
    %195 = vmatprep.subr.mxu0 0.0
    %196 = vmatpush1.msra.mxu0 0.0
    %197 = vmatprep.subr.mxu0 0.0
    %198 = vmatpush1.msra.mxu0 0.0
    %199 = vmatprep.subr.mxu0 0.0
    %200 = vmatpush1.msra.mxu0 0.0
    %201 = vmatprep.subr.mxu0 0.0
    %202 = vmatpush1.msra.mxu0 0.0
    %203 = vmatprep.subr.mxu0 0.0
    %204 = vmatpush1.msra.mxu0 0.0
    %205 = vmatprep.subr.mxu0 0.0
    %206 = vmatpush1.msra.mxu0 0.0
    %207 = vmatprep.subr.mxu0 0.0
    %208 = vmatpush1.msra.mxu0 0.0
    %209 = vmatprep.subr.mxu0 0.0
    %210 = vmatpush1.msra.mxu0 0.0
    %211 = vmatprep.subr.mxu0 0.0
    %212 = vmatpush1.msra.mxu0 0.0
    %213 = vmatprep.subr.mxu0 0.0
    %214 = vmatpush1.msra.mxu0 0.0
    %215 = vmatprep.subr.mxu0 0.0
    %216 = vmatpush1.msra.mxu0 0.0
    %217 = vmatprep.subr.mxu0 0.0
    %218 = vmatpush1.msra.mxu0 0.0
    %219 = vmatprep.subr.mxu0 0.0
    %220 = vmatpush1.msra.mxu0 0.0
    %221 = vmatprep.subr.mxu0 0.0
    %222 = vmatpush1.msra.mxu0 0.0
    %223 = vmatprep.subr.mxu0 0.0
    %224 = vmatpush1.msra.mxu0 0.0
    %225 = vmatprep.subr.mxu0 0.0
    %226 = vmatpush1.msra.mxu0 0.0
    %227 = vmatprep.subr.mxu0 0.0
    %228 = vmatpush1.msra.mxu0 0.0
    %229 = vmatprep.subr.mxu0 0.0
    %230 = vmatpush1.msra.mxu0 0.0
    %231 = vmatprep.subr.mxu0 0.0
    %232 = vmatpush1.msra.mxu0 0.0
    %233 = vmatprep.subr.mxu0 0.0
    %234 = vmatpush1.msra.mxu0 0.0
    %235 = vmatprep.subr.mxu0 0.0
    %236 = vmatpush1.msra.mxu0 0.0
    %237 = vmatprep.mubr.f32.mxu0 0.0
    %238 = vmatmul.mubr.f32.gmra.mrb[0].mxu0 %v164
    %v239 = vpop.f32.mrb[0].mxu0
    %v240 = vadd.f32 %v155, %v239
    %v241 = vpop.f32.mrb[0].mxu0
    %242 = vmatprep.mubr.f32.mxu0 0.0
    %243 = vmatmul.mubr.f32.gmra.mrb[0].mxu0 %v167
    %v244 = vpop.f32.mrb[0].mxu0
    %v245 = vadd.f32 %v160, %v244
    %v246 = vpop.f32.mrb[0].mxu0
    %247 = vdwg.mxu0
    %v248 = vmax.f32 %v240, 0.0
    %v249 = vmax.f32 %v245, 0.0
    %250 = vst [vmem:[%s5] sm:$0xff] %v248
    %251 = vst [vmem:[%s5 + $0x8] sm:$0x3] %v249
    // Predicated region
    $region22: #{mlp_encoder.2} parent=1 // pred_check
      _
    $region23: #{mlp_encoder.2} parent=1 // pred_check_branch
      %253 = sbr.rel (0) target = $region25
    $region24: #{mlp_encoder.2} parent=1 // pred_region
      _
    $region25: #{mlp_encoder.2} parent=1 // pred_fallthru
      _
    // Predicated region
    $region26: #{mlp_encoder.2} parent=1 // pred_check
      _
    $region27: #{mlp_encoder.2} parent=1 // pred_check_branch
      %255 = sbr.rel (0) target = $region29
    $region28: #{mlp_encoder.2} parent=1 // pred_region
      _
    $region29: #{mlp_encoder.2} parent=1 // pred_fallthru
      _

</llo_original>
